<compile_context>
chip_gen: v7x
topology: tpu7x:2x2x1
jax: 0.10.0
libtpu: 0.0.40
codegen_flags: <defaults>
</compile_context>

<pallas_src>
import jax
import jax.numpy as jnp
from jax.experimental import pallas as pl
from jax.experimental.pallas import tpu as pltpu


STATE_SPACE = 8
H1, H2, H3 = 32, 64, 32
ACTION_SPACE = 5


def _round_up(n, m):
    return ((n + m - 1) // m) * m


def _mlp_kernel(xT_ref,
                w1_ref, b1_ref,
                w2_ref, b2_ref,
                w3_ref, b3_ref,
                w4_ref, b4_ref,
                out_ref):
    """Processes one (features, TB) batch tile; batch is on the lane axis."""
    cdt = xT_ref.dtype  # compute dtype (float32 or bfloat16)

    h = xT_ref[...]                                                  # (8, TB)

    h = jnp.dot(w1_ref[...], h, preferred_element_type=jnp.float32) + b1_ref[...]
    h = jnp.maximum(h, 0.0).astype(cdt)                              # (32, TB)

    h = jnp.dot(w2_ref[...], h, preferred_element_type=jnp.float32) + b2_ref[...]
    h = jnp.maximum(h, 0.0).astype(cdt)                              # (64, TB)

    h = jnp.dot(w3_ref[...], h, preferred_element_type=jnp.float32) + b3_ref[...]
    h = jnp.maximum(h, 0.0).astype(cdt)                              # (32, TB)

    y = jnp.dot(w4_ref[...], h, preferred_element_type=jnp.float32) + b4_ref[...]
    out_ref[...] = y.astype(out_ref.dtype)                           # (5, TB)


def model_network_forward(x, params, *, tile_b=512, compute_dtype=jnp.float32):
    """x: (B, 8) float32 -> (B, 5) float32.

    params: list of (w, b) with w in PyTorch layout (out_features, in_features)
            and b of shape (out_features, 1).
    """
    (w1, b1), (w2, b2), (w3, b3), (w4, b4) = params
    B = x.shape[0]

    # Batch tile: >= 128 (lane width), multiple of 128, no bigger than needed.
    tile_b = _round_up(max(tile_b, 128), 128)
    TB = min(tile_b, _round_up(B, 128))
    Bp = _round_up(B, TB)
    grid = (Bp // TB,)

    # Layout plumbing in the wrapper: transpose so batch is on lanes, pad batch.
    xT = jnp.pad(x.astype(compute_dtype).T, ((0, 0), (0, Bp - B)))   # (8, Bp)

    cd = lambda w: w.astype(compute_dtype)
    f32 = lambda b: b.astype(jnp.float32)

    resident = lambda shape: pl.BlockSpec(shape, lambda i: (0, 0))

    out_t = pl.pallas_call(
        _mlp_kernel,
        out_shape=jax.ShapeDtypeStruct((ACTION_SPACE, Bp), jnp.float32),
        grid=grid,
        in_specs=[
            pl.BlockSpec((STATE_SPACE, TB), lambda i: (0, i)),       # x^T tile
            resident((H1, STATE_SPACE)),  resident((H1, 1)),
            resident((H2, H1)),           resident((H2, 1)),
            resident((H3, H2)),           resident((H3, 1)),
            resident((ACTION_SPACE, H3)), resident((ACTION_SPACE, 1)),
        ],
        out_specs=pl.BlockSpec((ACTION_SPACE, TB), lambda i: (0, i)),
        compiler_params=pltpu.CompilerParams(
            dimension_semantics=("parallel",),
        ),
    )(xT, cd(w1), f32(b1), cd(w2), f32(b2), cd(w3), f32(b3), cd(w4), f32(b4))

    return out_t[:, :B].T                                            # (B, 5)


def init_params(key):
    """PyTorch nn.Linear default init U[-1/sqrt(fan_in), 1/sqrt(fan_in)].
    Weights are stored PyTorch-native (out_features, in_features); biases (out, 1)."""
    dims = [(STATE_SPACE, H1), (H1, H2), (H2, H3), (H3, ACTION_SPACE)]
    params = []
    for (fan_in, fan_out) in dims:
        key, kw, kb = jax.random.split(key, 3)
        bound = 1.0 / jnp.sqrt(fan_in)
        w = jax.random.uniform(kw, (fan_out, fan_in), jnp.float32, -bound, bound)
        b = jax.random.uniform(kb, (fan_out, 1), jnp.float32, -bound, bound)
        params.append((w, b))
    return params


def _reference_forward(x, params):
    h = x
    for i, (w, b) in enumerate(params):
        h = h @ w.T + b[:, 0]
        if i < len(params) - 1:
            h = jnp.maximum(h, 0.0)
    return h


if __name__ == "__main__":
    key = jax.random.PRNGKey(0)
    key, kx1, kx2 = jax.random.split(key, 3)
    params = init_params(key)

    # Small batch (as in the original test): single grid step, padded to 128.
    batch = 8
    x = jax.random.normal(kx1, (batch, STATE_SPACE), jnp.float32)
    out = jax.block_until_ready(model_network_forward(x, params))
    ref = _reference_forward(x, params)
    assert out.shape == (batch, ACTION_SPACE)
    assert jnp.allclose(out, ref, atol=1e-5, rtol=1e-5)

    # Multi-step grid + batch padding path (B not a multiple of the tile).
    batch2 = 300
    x2 = jax.random.normal(kx2, (batch2, STATE_SPACE), jnp.float32)
    out2 = jax.block_until_ready(model_network_forward(x2, params, tile_b=128))
    ref2 = _reference_forward(x2, params)
    assert out2.shape == (batch2, ACTION_SPACE)
    assert jnp.allclose(out2, ref2, atol=1e-5, rtol=1e-5)

    # bf16 streaming path (halves input HBM traffic; fp32 MXU accumulation).
    out_bf16 = jax.block_until_ready(
        model_network_forward(x, params, compute_dtype=jnp.bfloat16))
    assert out_bf16.shape == (batch, ACTION_SPACE)
    assert jnp.all(jnp.isfinite(out_bf16))
    assert jnp.allclose(out_bf16, ref, atol=1e-1, rtol=1e-1)

    print("KERNEL_OK")
</pallas_src>

<mosaic_0001>
module attributes {stable_mosaic.version = 11 : i64} {
  func.func @_mlp_kernel(%arg0: i32, %arg1: memref<8x128xf32, #tpu.memory_space<vmem>>, %arg2: memref<32x8xf32, #tpu.memory_space<vmem>>, %arg3: memref<32x1xf32, #tpu.memory_space<vmem>>, %arg4: memref<64x32xf32, #tpu.memory_space<vmem>>, %arg5: memref<64x1xf32, #tpu.memory_space<vmem>>, %arg6: memref<32x64xf32, #tpu.memory_space<vmem>>, %arg7: memref<32x1xf32, #tpu.memory_space<vmem>>, %arg8: memref<5x32xf32, #tpu.memory_space<vmem>>, %arg9: memref<5x1xf32, #tpu.memory_space<vmem>>, %arg10: memref<5x128xf32, #tpu.memory_space<vmem>>) attributes {dimension_semantics = [#tpu.dimension_semantics<parallel>], iteration_bounds = array<i64: 1>, scalar_prefetch = 0 : i64, scratch_operands = 0 : i64, tpu.core_type = #tpu.core_type<tc>, window_params = [{transform_indices = @transform_0, window_bounds = array<i64: 8, 128>}, {pipeline_mode = #tpu.pipeline_mode<synchronous>, transform_indices = @transform_1, window_bounds = array<i64: 32, 8>}, {pipeline_mode = #tpu.pipeline_mode<synchronous>, transform_indices = @transform_2, window_bounds = array<i64: 32, 1>}, {pipeline_mode = #tpu.pipeline_mode<synchronous>, transform_indices = @transform_3, window_bounds = array<i64: 64, 32>}, {pipeline_mode = #tpu.pipeline_mode<synchronous>, transform_indices = @transform_4, window_bounds = array<i64: 64, 1>}, {pipeline_mode = #tpu.pipeline_mode<synchronous>, transform_indices = @transform_5, window_bounds = array<i64: 32, 64>}, {pipeline_mode = #tpu.pipeline_mode<synchronous>, transform_indices = @transform_6, window_bounds = array<i64: 32, 1>}, {pipeline_mode = #tpu.pipeline_mode<synchronous>, transform_indices = @transform_7, window_bounds = array<i64: 5, 32>}, {pipeline_mode = #tpu.pipeline_mode<synchronous>, transform_indices = @transform_8, window_bounds = array<i64: 5, 1>}, {transform_indices = @transform_9, window_bounds = array<i64: 5, 128>}]} {
    %c0 = arith.constant 0 : index
    %c0_0 = arith.constant 0 : index
    %0 = vector.load %arg1[%c0, %c0_0] : memref<8x128xf32, #tpu.memory_space<vmem>>, vector<8x128xf32>
    %c0_1 = arith.constant 0 : index
    %c0_2 = arith.constant 0 : index
    %1 = vector.load %arg2[%c0_1, %c0_2] : memref<32x8xf32, #tpu.memory_space<vmem>>, vector<32x8xf32>
    %cst = arith.constant dense<0.000000e+00> : vector<32x128xf32>
    %2 = tpu.matmul %1, %0, %cst {dimension_numbers = #tpu.dot_dimension_numbers<[1], [0], [0], [1], [0, 0, 1, 1], [], []>} : vector<32x8xf32>, vector<8x128xf32>, vector<32x128xf32> -> vector<32x128xf32>
    %c0_3 = arith.constant 0 : index
    %c0_4 = arith.constant 0 : index
    %3 = vector.load %arg3[%c0_3, %c0_4] : memref<32x1xf32, #tpu.memory_space<vmem>>, vector<32x1xf32>
    %4 = vector.broadcast %3 : vector<32x1xf32> to vector<32x128xf32>
    %5 = arith.addf %2, %4 : vector<32x128xf32>
    %cst_5 = arith.constant 0.000000e+00 : f32
    %6 = vector.broadcast %cst_5 : f32 to vector<32x128xf32>
    %7 = arith.maximumf %5, %6 : vector<32x128xf32>
    %c0_6 = arith.constant 0 : index
    %c0_7 = arith.constant 0 : index
    %8 = vector.load %arg4[%c0_6, %c0_7] : memref<64x32xf32, #tpu.memory_space<vmem>>, vector<64x32xf32>
    %cst_8 = arith.constant dense<0.000000e+00> : vector<64x128xf32>
    %9 = tpu.matmul %8, %7, %cst_8 {dimension_numbers = #tpu.dot_dimension_numbers<[1], [0], [0], [1], [0, 0, 1, 1], [], []>} : vector<64x32xf32>, vector<32x128xf32>, vector<64x128xf32> -> vector<64x128xf32>
    %c0_9 = arith.constant 0 : index
    %c0_10 = arith.constant 0 : index
    %10 = vector.load %arg5[%c0_9, %c0_10] : memref<64x1xf32, #tpu.memory_space<vmem>>, vector<64x1xf32>
    %11 = vector.broadcast %10 : vector<64x1xf32> to vector<64x128xf32>
    %12 = arith.addf %9, %11 : vector<64x128xf32>
    %cst_11 = arith.constant 0.000000e+00 : f32
    %13 = vector.broadcast %cst_11 : f32 to vector<64x128xf32>
    %14 = arith.maximumf %12, %13 : vector<64x128xf32>
    %c0_12 = arith.constant 0 : index
    %c0_13 = arith.constant 0 : index
    %15 = vector.load %arg6[%c0_12, %c0_13] : memref<32x64xf32, #tpu.memory_space<vmem>>, vector<32x64xf32>
    %cst_14 = arith.constant dense<0.000000e+00> : vector<32x128xf32>
    %16 = tpu.matmul %15, %14, %cst_14 {dimension_numbers = #tpu.dot_dimension_numbers<[1], [0], [0], [1], [0, 0, 1, 1], [], []>} : vector<32x64xf32>, vector<64x128xf32>, vector<32x128xf32> -> vector<32x128xf32>
    %c0_15 = arith.constant 0 : index
    %c0_16 = arith.constant 0 : index
    %17 = vector.load %arg7[%c0_15, %c0_16] : memref<32x1xf32, #tpu.memory_space<vmem>>, vector<32x1xf32>
    %18 = vector.broadcast %17 : vector<32x1xf32> to vector<32x128xf32>
    %19 = arith.addf %16, %18 : vector<32x128xf32>
    %cst_17 = arith.constant 0.000000e+00 : f32
    %20 = vector.broadcast %cst_17 : f32 to vector<32x128xf32>
    %21 = arith.maximumf %19, %20 : vector<32x128xf32>
    %c0_18 = arith.constant 0 : index
    %c0_19 = arith.constant 0 : index
    %22 = vector.load %arg8[%c0_18, %c0_19] : memref<5x32xf32, #tpu.memory_space<vmem>>, vector<5x32xf32>
    %cst_20 = arith.constant dense<0.000000e+00> : vector<5x128xf32>
    %23 = tpu.matmul %22, %21, %cst_20 {dimension_numbers = #tpu.dot_dimension_numbers<[1], [0], [0], [1], [0, 0, 1, 1], [], []>} : vector<5x32xf32>, vector<32x128xf32>, vector<5x128xf32> -> vector<5x128xf32>
    %c0_21 = arith.constant 0 : index
    %c0_22 = arith.constant 0 : index
    %24 = vector.load %arg9[%c0_21, %c0_22] : memref<5x1xf32, #tpu.memory_space<vmem>>, vector<5x1xf32>
    %25 = vector.broadcast %24 : vector<5x1xf32> to vector<5x128xf32>
    %26 = arith.addf %23, %25 : vector<5x128xf32>
    %c0_23 = arith.constant 0 : index
    %c0_24 = arith.constant 0 : index
    %27 = vector.load %arg10[%c0_23, %c0_24] : memref<5x128xf32, #tpu.memory_space<vmem>>, vector<5x128xf32>
    tpu.vector_store %arg10[%c0_23, %c0_24], %26 {strides = array<i32>} : memref<5x128xf32, #tpu.memory_space<vmem>>, vector<5x128xf32>,
    return
  }
  func.func @transform_0(%arg0: i32) -> (i32, i32) {
    %c0_i32 = arith.constant 0 : i32
    %c0_i32_0 = arith.constant 0 : i32
    return %c0_i32, %arg0 : i32, i32
  }
  func.func @transform_1(%arg0: i32) -> (i32, i32) {
    %c0_i32 = arith.constant 0 : i32
    %c0_i32_0 = arith.constant 0 : i32
    %c0_i32_1 = arith.constant 0 : i32
    return %c0_i32, %c0_i32_0 : i32, i32
  }
  func.func @transform_2(%arg0: i32) -> (i32, i32) {
    %c0_i32 = arith.constant 0 : i32
    %c0_i32_0 = arith.constant 0 : i32
    %c0_i32_1 = arith.constant 0 : i32
    return %c0_i32, %c0_i32_0 : i32, i32
  }
  func.func @transform_3(%arg0: i32) -> (i32, i32) {
    %c0_i32 = arith.constant 0 : i32
    %c0_i32_0 = arith.constant 0 : i32
    %c0_i32_1 = arith.constant 0 : i32
    return %c0_i32, %c0_i32_0 : i32, i32
  }
  func.func @transform_4(%arg0: i32) -> (i32, i32) {
    %c0_i32 = arith.constant 0 : i32
    %c0_i32_0 = arith.constant 0 : i32
    %c0_i32_1 = arith.constant 0 : i32
    return %c0_i32, %c0_i32_0 : i32, i32
  }
  func.func @transform_5(%arg0: i32) -> (i32, i32) {
    %c0_i32 = arith.constant 0 : i32
    %c0_i32_0 = arith.constant 0 : i32
    %c0_i32_1 = arith.constant 0 : i32
    return %c0_i32, %c0_i32_0 : i32, i32
  }
  func.func @transform_6(%arg0: i32) -> (i32, i32) {
    %c0_i32 = arith.constant 0 : i32
    %c0_i32_0 = arith.constant 0 : i32
    %c0_i32_1 = arith.constant 0 : i32
    return %c0_i32, %c0_i32_0 : i32, i32
  }
  func.func @transform_7(%arg0: i32) -> (i32, i32) {
    %c0_i32 = arith.constant 0 : i32
    %c0_i32_0 = arith.constant 0 : i32
    %c0_i32_1 = arith.constant 0 : i32
    return %c0_i32, %c0_i32_0 : i32, i32
  }
  func.func @transform_8(%arg0: i32) -> (i32, i32) {
    %c0_i32 = arith.constant 0 : i32
    %c0_i32_0 = arith.constant 0 : i32
    %c0_i32_1 = arith.constant 0 : i32
    return %c0_i32, %c0_i32_0 : i32, i32
  }
  func.func @transform_9(%arg0: i32) -> (i32, i32) {
    %c0_i32 = arith.constant 0 : i32
    %c0_i32_0 = arith.constant 0 : i32
    return %c0_i32, %arg0 : i32, i32
  }
}

</mosaic_0001>

<llo_original>
// kernel: tpu_custom_call.1
$region0: #{tpu_custom_call.1}
  #allocation0 [shape = 'u32[]', space=smem, size = 0x4, offset = 0x4, fixed_abs, tag = 'smem constant byte address 0x4 - core index']
  #allocation1 [shape = 'u32[144,128]{1,0:T(1,128)}', space=vmem, size = 0x12000, scoped, tag = 'internal scratch']
  %s0 = inlined_call_operand.vmem [shape: f32[8,128], index: 0, kind: input, shape index: {}]
  %s1 = inlined_call_operand.vmem [shape: f32[32,8], index: 1, kind: input, shape index: {}]
  %s2 = inlined_call_operand.vmem [shape: f32[32,1], index: 2, kind: input, shape index: {}]
  %s3 = inlined_call_operand.vmem [shape: f32[64,32], index: 3, kind: input, shape index: {}]
  %s4 = inlined_call_operand.vmem [shape: f32[64,1], index: 4, kind: input, shape index: {}]
  %s5 = inlined_call_operand.vmem [shape: f32[32,64], index: 5, kind: input, shape index: {}]
  %s6 = inlined_call_operand.vmem [shape: f32[32,1], index: 6, kind: input, shape index: {}]
  %s7 = inlined_call_operand.vmem [shape: f32[5,32], index: 7, kind: input, shape index: {}]
  %s8 = inlined_call_operand.vmem [shape: f32[5,1], index: 8, kind: input, shape index: {}]
  %s9 = inlined_call_operand.hbm [shape: f32[5,128], index: 9, kind: output, shape index: {}]
  %s10 = sld [smem:[#allocation0]]
  $region46: #{tpu_custom_call.1} parent=0
    _
  %s12 = ssub.s32 1, %s10
  %s13 = scalar_select 0, %s12, %s10
  $region1: #{tpu_custom_call.1} parent=0
    #allocation2 [shape = 'u8[4096]{0}', space=vmem, size = 0x1000, scoped, tag = 'output window, operand 0, single buffered']
    #allocation3 [shape = 's32[1]{0}', space=sflag, size = 0x4, scoped, tag = 'scoped memory for tpu_custom_call.1']
    %14 = vsyncpa [#allocation3], 0
    // Predicated region
    $region2: #{tpu_custom_call.1} parent=1 // pred_check
      _
    $region3: #{tpu_custom_call.1} parent=1 // pred_check_branch
      %16 = sbr.rel (0) target = $region5
    $region4: #{tpu_custom_call.1} parent=1 // pred_region
      _
    $region5: #{tpu_custom_call.1} parent=1 // pred_fallthru
      _
    // Predicated region
    $region6: #{tpu_custom_call.1} parent=1 // pred_check
      _
    $region7: #{tpu_custom_call.1} parent=1 // pred_check_branch
      %18 = sbr.rel (0) target = $region9
    $region8: #{tpu_custom_call.1} parent=1 // pred_region
      _
    $region9: #{tpu_custom_call.1} parent=1 // pred_fallthru
      _
    // Predicated region
    $region10: #{tpu_custom_call.1} parent=1 // pred_check
      _
    $region11: #{tpu_custom_call.1} parent=1 // pred_check_branch
      %20 = sbr.rel (0) target = $region13
    $region12: #{tpu_custom_call.1} parent=1 // pred_region
      _
    $region13: #{tpu_custom_call.1} parent=1 // pred_fallthru
      _
    // Predicated region
    $region14: #{tpu_custom_call.1} parent=1 // pred_check
      _
    $region15: #{tpu_custom_call.1} parent=1 // pred_check_branch
      %22 = sbr.rel (0) target = $region17
    $region16: #{tpu_custom_call.1} parent=1 // pred_region
      _
    $region17: #{tpu_custom_call.1} parent=1 // pred_fallthru
      _
    // Predicated region
    $region18: #{tpu_custom_call.1} parent=1 // pred_check
      _
    $region19: #{tpu_custom_call.1} parent=1 // pred_check_branch
      %24 = sbr.rel (0) target = $region21
    $region20: #{tpu_custom_call.1} parent=1 // pred_region
      _
    $region21: #{tpu_custom_call.1} parent=1 // pred_fallthru
      _
    // Predicated region
    $region22: #{tpu_custom_call.1} parent=1 // pred_check
      _
    $region23: #{tpu_custom_call.1} parent=1 // pred_check_branch
      %26 = sbr.rel (0) target = $region25
    $region24: #{tpu_custom_call.1} parent=1 // pred_region
      _
    $region25: #{tpu_custom_call.1} parent=1 // pred_fallthru
      _
    // Predicated region
    $region26: #{tpu_custom_call.1} parent=1 // pred_check
      _
    $region27: #{tpu_custom_call.1} parent=1 // pred_check_branch
      %28 = sbr.rel (0) target = $region29
    $region28: #{tpu_custom_call.1} parent=1 // pred_region
      _
    $region29: #{tpu_custom_call.1} parent=1 // pred_fallthru
      _
    // Predicated region
    $region30: #{tpu_custom_call.1} parent=1 // pred_check
      _
    $region31: #{tpu_custom_call.1} parent=1 // pred_check_branch
      %30 = sbr.rel (0) target = $region33
    $region32: #{tpu_custom_call.1} parent=1 // pred_region
      _
    $region33: #{tpu_custom_call.1} parent=1 // pred_fallthru
      _
    // Predicated region
    $region34: #{tpu_custom_call.1} parent=1 // pred_check
      _
    $region35: #{tpu_custom_call.1} parent=1 // pred_check_branch
      %32 = sbr.rel (0) target = $region37
    $region36: #{tpu_custom_call.1} parent=1 // pred_region
      _
    $region37: #{tpu_custom_call.1} parent=1 // pred_fallthru
      _
    %v33 = vld [vmem:[%s0] sm:$0xff]
    %v34 = vld [vmem:[%s1] sm:$0xff]
    %v35 = vld [vmem:[%s1 + $0x8] sm:$0xff]
    %v36 = vld [vmem:[%s1 + $0x10] sm:$0xff]
    %v37 = vld [vmem:[%s1 + $0x18] sm:$0xff]
    %v38 = vld [vmem:[%s2] sm:$0xff]
    %v39 = vld [vmem:[%s2 + $0x8] sm:$0xff]
    %v40 = vld [vmem:[%s2 + $0x10] sm:$0xff]
    %v41 = vld [vmem:[%s2 + $0x18] sm:$0xff]
    %43 = vset.pattern.permute.xlu0 0
    %44 = vperm.xlu0 %43, %v38
    %v45 = vpop.permute.xlu0 %44
    %48 = vset.pattern.permute.xlu0 0
    %49 = vperm.xlu0 %48, %v39
    %v50 = vpop.permute.xlu0 %49
    %53 = vset.pattern.permute.xlu0 0
    %54 = vperm.xlu0 %53, %v40
    %v55 = vpop.permute.xlu0 %54
    %58 = vset.pattern.permute.xlu0 0
    %59 = vperm.xlu0 %58, %v41
    %v60 = vpop.permute.xlu0 %59
    %vm62 = vcmask 64512
    %v64 = vsel %vm62, %v34, 0
    %v67 = vsel %vm62, %v35, 0
    %v70 = vsel %vm62, %v36, 0
    %v73 = vsel %vm62, %v37, 0
    %75 = vmatprep.subr.mxu0 0.0
    %76 = vmatpush1.msra.mxu0 %v33
    %77 = vmatprep.subr.mxu0 0.0
    %78 = vmatpush1.msra.mxu0 0.0
    %79 = vmatprep.subr.mxu0 0.0
    %80 = vmatpush1.msra.mxu0 0.0
    %81 = vmatprep.subr.mxu0 0.0
    %82 = vmatpush1.msra.mxu0 0.0
    %83 = vmatprep.subr.mxu0 0.0
    %84 = vmatpush1.msra.mxu0 0.0
    %85 = vmatprep.subr.mxu0 0.0
    %86 = vmatpush1.msra.mxu0 0.0
    %87 = vmatprep.subr.mxu0 0.0
    %88 = vmatpush1.msra.mxu0 0.0
    %89 = vmatprep.subr.mxu0 0.0
    %90 = vmatpush1.msra.mxu0 0.0
    %91 = vmatprep.subr.mxu0 0.0
    %92 = vmatpush1.msra.mxu0 0.0
    %93 = vmatprep.subr.mxu0 0.0
    %94 = vmatpush1.msra.mxu0 0.0
    %95 = vmatprep.subr.mxu0 0.0
    %96 = vmatpush1.msra.mxu0 0.0
    %97 = vmatprep.subr.mxu0 0.0
    %98 = vmatpush1.msra.mxu0 0.0
    %99 = vmatprep.subr.mxu0 0.0
    %100 = vmatpush1.msra.mxu0 0.0
    %101 = vmatprep.subr.mxu0 0.0
    %102 = vmatpush1.msra.mxu0 0.0
    %103 = vmatprep.subr.mxu0 0.0
    %104 = vmatpush1.msra.mxu0 0.0
    %105 = vmatprep.subr.mxu0 0.0
    %106 = vmatpush1.msra.mxu0 0.0
    %107 = vmatprep.subr.mxu0 0.0
    %108 = vmatpush1.msra.mxu0 0.0
    %109 = vmatprep.subr.mxu0 0.0
    %110 = vmatpush1.msra.mxu0 0.0
    %111 = vmatprep.subr.mxu0 0.0
    %112 = vmatpush1.msra.mxu0 0.0
    %113 = vmatprep.subr.mxu0 0.0
    %114 = vmatpush1.msra.mxu0 0.0
    %115 = vmatprep.subr.mxu0 0.0
    %116 = vmatpush1.msra.mxu0 0.0
    %117 = vmatprep.subr.mxu0 0.0
    %118 = vmatpush1.msra.mxu0 0.0
    %119 = vmatprep.subr.mxu0 0.0
    %120 = vmatpush1.msra.mxu0 0.0
    %121 = vmatprep.subr.mxu0 0.0
    %122 = vmatpush1.msra.mxu0 0.0
    %123 = vmatprep.subr.mxu0 0.0
    %124 = vmatpush1.msra.mxu0 0.0
    %125 = vmatprep.subr.mxu0 0.0
    %126 = vmatpush1.msra.mxu0 0.0
    %127 = vmatprep.subr.mxu0 0.0
    %128 = vmatpush1.msra.mxu0 0.0
    %129 = vmatprep.subr.mxu0 0.0
    %130 = vmatpush1.msra.mxu0 0.0
    %131 = vmatprep.subr.mxu0 0.0
    %132 = vmatpush1.msra.mxu0 0.0
    %133 = vmatprep.subr.mxu0 0.0
    %134 = vmatpush1.msra.mxu0 0.0
    %135 = vmatprep.subr.mxu0 0.0
    %136 = vmatpush1.msra.mxu0 0.0
    %137 = vmatprep.subr.mxu0 0.0
    %138 = vmatpush1.msra.mxu0 0.0
    %139 = vmatprep.mubr.f32.mxu0 0.0
    %140 = vmatmul.mubr.f32.gmra.mrb[0].mxu0 %v64
    %v141 = vpop.f32.mrb[0].mxu0
    %v142 = vadd.f32 %v45, %v141
    %v143 = vpop.f32.mrb[0].mxu0
    %144 = vmatprep.mubr.f32.mxu0 0.0
    %145 = vmatmul.mubr.f32.gmra.mrb[0].mxu0 %v67
    %v146 = vpop.f32.mrb[0].mxu0
    %v147 = vadd.f32 %v50, %v146
    %v148 = vpop.f32.mrb[0].mxu0
    %149 = vmatprep.mubr.f32.mxu0 0.0
    %150 = vmatmul.mubr.f32.gmra.mrb[0].mxu0 %v70
    %v151 = vpop.f32.mrb[0].mxu0
    %v152 = vadd.f32 %v55, %v151
    %v153 = vpop.f32.mrb[0].mxu0
    %154 = vmatprep.mubr.f32.mxu0 0.0
    %155 = vmatmul.mubr.f32.gmra.mrb[0].mxu0 %v73
    %v156 = vpop.f32.mrb[0].mxu0
    %v157 = vadd.f32 %v60, %v156
    %v158 = vpop.f32.mrb[0].mxu0
    %159 = vdwg.mxu0
    %v160 = vmax.f32 %v142, 0.0
    %v161 = vmax.f32 %v147, 0.0
    %v162 = vmax.f32 %v152, 0.0
    %v163 = vmax.f32 %v157, 0.0
    %v164 = vld [vmem:[%s3] sm:$0xff]
    %v165 = vld [vmem:[%s3 + $0x8] sm:$0xff]
    %v166 = vld [vmem:[%s3 + $0x10] sm:$0xff]
    %v167 = vld [vmem:[%s3 + $0x18] sm:$0xff]
    %v168 = vld [vmem:[%s3 + $0x20] sm:$0xff]
    %v169 = vld [vmem:[%s3 + $0x28] sm:$0xff]
    %v170 = vld [vmem:[%s3 + $0x30] sm:$0xff]
    %v171 = vld [vmem:[%s3 + $0x38] sm:$0xff]
    %v172 = vld [vmem:[%s4] sm:$0xff]
    %v173 = vld [vmem:[%s4 + $0x8] sm:$0xff]
    %v174 = vld [vmem:[%s4 + $0x10] sm:$0xff]
    %v175 = vld [vmem:[%s4 + $0x18] sm:$0xff]
    %v176 = vld [vmem:[%s4 + $0x20] sm:$0xff]
    %v177 = vld [vmem:[%s4 + $0x28] sm:$0xff]
    %v178 = vld [vmem:[%s4 + $0x30] sm:$0xff]
    %v179 = vld [vmem:[%s4 + $0x38] sm:$0xff]
    %181 = vset.pattern.permute.xlu0 0
    %182 = vperm.xlu0 %181, %v172
    %v183 = vpop.permute.xlu0 %182
    %186 = vset.pattern.permute.xlu0 0
    %187 = vperm.xlu0 %186, %v173
    %v188 = vpop.permute.xlu0 %187
    %191 = vset.pattern.permute.xlu0 0
    %192 = vperm.xlu0 %191, %v174
    %v193 = vpop.permute.xlu0 %192
    %196 = vset.pattern.permute.xlu0 0
    %197 = vperm.xlu0 %196, %v175
    %v198 = vpop.permute.xlu0 %197
    %201 = vset.pattern.permute.xlu0 0
    %202 = vperm.xlu0 %201, %v176
    %v203 = vpop.permute.xlu0 %202
    %206 = vset.pattern.permute.xlu0 0
    %207 = vperm.xlu0 %206, %v177
    %v208 = vpop.permute.xlu0 %207
    %211 = vset.pattern.permute.xlu0 0
    %212 = vperm.xlu0 %211, %v178
    %v213 = vpop.permute.xlu0 %212
    %216 = vset.pattern.permute.xlu0 0
    %217 = vperm.xlu0 %216, %v179
    %v218 = vpop.permute.xlu0 %217
    %vm220 = vcmask 261120
    %v222 = vsel %vm220, %v164, 0
    %v225 = vsel %vm220, %v165, 0
    %v228 = vsel %vm220, %v166, 0
    %v231 = vsel %vm220, %v167, 0
    %v234 = vsel %vm220, %v168, 0
    %v237 = vsel %vm220, %v169, 0
    %v240 = vsel %vm220, %v170, 0
    %v243 = vsel %vm220, %v171, 0
    %245 = vmatprep.subr.mxu0 0.0
    %246 = vmatpush1.msra.mxu0 %v160
    %247 = vmatprep.subr.mxu0 0.0
    %248 = vmatpush1.msra.mxu0 %v161
    %249 = vmatprep.subr.mxu0 0.0
    %250 = vmatpush1.msra.mxu0 %v162
    %251 = vmatprep.subr.mxu0 0.0
    %252 = vmatpush1.msra.mxu0 %v163
    %253 = vmatprep.subr.mxu0 0.0
    %254 = vmatpush1.msra.mxu0 0.0
    %255 = vmatprep.subr.mxu0 0.0
    %256 = vmatpush1.msra.mxu0 0.0
    %257 = vmatprep.subr.mxu0 0.0
    %258 = vmatpush1.msra.mxu0 0.0
    %259 = vmatprep.subr.mxu0 0.0
    %260 = vmatpush1.msra.mxu0 0.0
    %261 = vmatprep.subr.mxu0 0.0
    %262 = vmatpush1.msra.mxu0 0.0
    %263 = vmatprep.subr.mxu0 0.0
    %264 = vmatpush1.msra.mxu0 0.0
    %265 = vmatprep.subr.mxu0 0.0
    %266 = vmatpush1.msra.mxu0 0.0
    %267 = vmatprep.subr.mxu0 0.0
    %268 = vmatpush1.msra.mxu0 0.0
    %269 = vmatprep.subr.mxu0 0.0
    %270 = vmatpush1.msra.mxu0 0.0
    %271 = vmatprep.subr.mxu0 0.0
    %272 = vmatpush1.msra.mxu0 0.0
    %273 = vmatprep.subr.mxu0 0.0
    %274 = vmatpush1.msra.mxu0 0.0
    %275 = vmatprep.subr.mxu0 0.0
    %276 = vmatpush1.msra.mxu0 0.0
    %277 = vmatprep.subr.mxu0 0.0
    %278 = vmatpush1.msra.mxu0 0.0
    %279 = vmatprep.subr.mxu0 0.0
    %280 = vmatpush1.msra.mxu0 0.0
    %281 = vmatprep.subr.mxu0 0.0
    %282 = vmatpush1.msra.mxu0 0.0
    %283 = vmatprep.subr.mxu0 0.0
    %284 = vmatpush1.msra.mxu0 0.0
    %285 = vmatprep.subr.mxu0 0.0
    %286 = vmatpush1.msra.mxu0 0.0
    %287 = vmatprep.subr.mxu0 0.0
    %288 = vmatpush1.msra.mxu0 0.0
    %289 = vmatprep.subr.mxu0 0.0
    %290 = vmatpush1.msra.mxu0 0.0
    %291 = vmatprep.subr.mxu0 0.0
    %292 = vmatpush1.msra.mxu0 0.0
    %293 = vmatprep.subr.mxu0 0.0
    %294 = vmatpush1.msra.mxu0 0.0
    %295 = vmatprep.subr.mxu0 0.0
    %296 = vmatpush1.msra.mxu0 0.0
    %297 = vmatprep.subr.mxu0 0.0
    %298 = vmatpush1.msra.mxu0 0.0
    %299 = vmatprep.subr.mxu0 0.0
    %300 = vmatpush1.msra.mxu0 0.0
    %301 = vmatprep.subr.mxu0 0.0
    %302 = vmatpush1.msra.mxu0 0.0
    %303 = vmatprep.subr.mxu0 0.0
    %304 = vmatpush1.msra.mxu0 0.0
    %305 = vmatprep.subr.mxu0 0.0
    %306 = vmatpush1.msra.mxu0 0.0
    %307 = vmatprep.subr.mxu0 0.0
    %308 = vmatpush1.msra.mxu0 0.0
    %309 = vmatprep.mubr.f32.mxu0 0.0
    %310 = vmatmul.mubr.f32.gmra.mrb[0].mxu0 %v222
    %v311 = vpop.f32.mrb[0].mxu0
    %v312 = vadd.f32 %v183, %v311
    %v313 = vpop.f32.mrb[0].mxu0
    %314 = vmatprep.mubr.f32.mxu0 0.0
    %315 = vmatmul.mubr.f32.gmra.mrb[0].mxu0 %v225
    %v316 = vpop.f32.mrb[0].mxu0
    %v317 = vadd.f32 %v188, %v316
    %v318 = vpop.f32.mrb[0].mxu0
    %319 = vmatprep.mubr.f32.mxu0 0.0
    %320 = vmatmul.mubr.f32.gmra.mrb[0].mxu0 %v228
    %v321 = vpop.f32.mrb[0].mxu0
    %v322 = vadd.f32 %v193, %v321
    %v323 = vpop.f32.mrb[0].mxu0
    %324 = vmatprep.mubr.f32.mxu0 0.0
    %325 = vmatmul.mubr.f32.gmra.mrb[0].mxu0 %v231
    %v326 = vpop.f32.mrb[0].mxu0
    %v327 = vadd.f32 %v198, %v326
    %v328 = vpop.f32.mrb[0].mxu0
    %329 = vmatprep.mubr.f32.mxu0 0.0
    %330 = vmatmul.mubr.f32.gmra.mrb[0].mxu0 %v234
    %v331 = vpop.f32.mrb[0].mxu0
    %v332 = vadd.f32 %v203, %v331
    %v333 = vpop.f32.mrb[0].mxu0
    %334 = vmatprep.mubr.f32.mxu0 0.0
    %335 = vmatmul.mubr.f32.gmra.mrb[0].mxu0 %v237
    %v336 = vpop.f32.mrb[0].mxu0
    %v337 = vadd.f32 %v208, %v336
    %v338 = vpop.f32.mrb[0].mxu0
    %339 = vmatprep.mubr.f32.mxu0 0.0
    %340 = vmatmul.mubr.f32.gmra.mrb[0].mxu0 %v240
    %v341 = vpop.f32.mrb[0].mxu0
    %v342 = vadd.f32 %v213, %v341
    %v343 = vpop.f32.mrb[0].mxu0
    %344 = vmatprep.mubr.f32.mxu0 0.0
    %345 = vmatmul.mubr.f32.gmra.mrb[0].mxu0 %v243
    %v346 = vpop.f32.mrb[0].mxu0
    %v347 = vadd.f32 %v218, %v346
    %v348 = vpop.f32.mrb[0].mxu0
    %349 = vdwg.mxu0
    %v350 = vmax.f32 %v312, 0.0
    %v351 = vmax.f32 %v317, 0.0
    %v352 = vmax.f32 %v322, 0.0
    %v353 = vmax.f32 %v327, 0.0
    %v354 = vmax.f32 %v332, 0.0
    %v355 = vmax.f32 %v337, 0.0
    %v356 = vmax.f32 %v342, 0.0
    %v357 = vmax.f32 %v347, 0.0
    %v358 = vld [vmem:[%s5] sm:$0xff]
    %v359 = vld [vmem:[%s5 + $0x8] sm:$0xff]
    %v360 = vld [vmem:[%s5 + $0x10] sm:$0xff]
    %v361 = vld [vmem:[%s5 + $0x18] sm:$0xff]
    %v362 = vld [vmem:[%s6] sm:$0xff]
    %v363 = vld [vmem:[%s6 + $0x8] sm:$0xff]
    %v364 = vld [vmem:[%s6 + $0x10] sm:$0xff]
    %v365 = vld [vmem:[%s6 + $0x18] sm:$0xff]
    %367 = vset.pattern.permute.xlu0 0
    %368 = vperm.xlu0 %367, %v362
    %v369 = vpop.permute.xlu0 %368
    %372 = vset.pattern.permute.xlu0 0
    %373 = vperm.xlu0 %372, %v363
    %v374 = vpop.permute.xlu0 %373
    %377 = vset.pattern.permute.xlu0 0
    %378 = vperm.xlu0 %377, %v364
    %v379 = vpop.permute.xlu0 %378
    %382 = vset.pattern.permute.xlu0 0
    %383 = vperm.xlu0 %382, %v365
    %v384 = vpop.permute.xlu0 %383
    %vm386 = vcmask 523264
    %v388 = vsel %vm386, %v358, 0
    %v391 = vsel %vm386, %v359, 0
    %v394 = vsel %vm386, %v360, 0
    %v397 = vsel %vm386, %v361, 0
    %399 = vmatprep.subr.mxu0 0.0
    %400 = vmatpush1.msra.mxu0 %v350
    %401 = vmatprep.subr.mxu0 0.0
    %402 = vmatpush1.msra.mxu0 %v351
    %403 = vmatprep.subr.mxu0 0.0
    %404 = vmatpush1.msra.mxu0 %v352
    %405 = vmatprep.subr.mxu0 0.0
    %406 = vmatpush1.msra.mxu0 %v353
    %407 = vmatprep.subr.mxu0 0.0
    %408 = vmatpush1.msra.mxu0 %v354
    %409 = vmatprep.subr.mxu0 0.0
    %410 = vmatpush1.msra.mxu0 %v355
    %411 = vmatprep.subr.mxu0 0.0
    %412 = vmatpush1.msra.mxu0 %v356
    %413 = vmatprep.subr.mxu0 0.0
    %414 = vmatpush1.msra.mxu0 %v357
    %415 = vmatprep.subr.mxu0 0.0
    %416 = vmatpush1.msra.mxu0 0.0
    %417 = vmatprep.subr.mxu0 0.0
    %418 = vmatpush1.msra.mxu0 0.0
    %419 = vmatprep.subr.mxu0 0.0
    %420 = vmatpush1.msra.mxu0 0.0
    %421 = vmatprep.subr.mxu0 0.0
    %422 = vmatpush1.msra.mxu0 0.0
    %423 = vmatprep.subr.mxu0 0.0
    %424 = vmatpush1.msra.mxu0 0.0
    %425 = vmatprep.subr.mxu0 0.0
    %426 = vmatpush1.msra.mxu0 0.0
    %427 = vmatprep.subr.mxu0 0.0
    %428 = vmatpush1.msra.mxu0 0.0
    %429 = vmatprep.subr.mxu0 0.0
    %430 = vmatpush1.msra.mxu0 0.0
    %431 = vmatprep.subr.mxu0 0.0
    %432 = vmatpush1.msra.mxu0 0.0
    %433 = vmatprep.subr.mxu0 0.0
    %434 = vmatpush1.msra.mxu0 0.0
    %435 = vmatprep.subr.mxu0 0.0
    %436 = vmatpush1.msra.mxu0 0.0
    %437 = vmatprep.subr.mxu0 0.0
    %438 = vmatpush1.msra.mxu0 0.0
    %439 = vmatprep.subr.mxu0 0.0
    %440 = vmatpush1.msra.mxu0 0.0
    %441 = vmatprep.subr.mxu0 0.0
    %442 = vmatpush1.msra.mxu0 0.0
    %443 = vmatprep.subr.mxu0 0.0
    %444 = vmatpush1.msra.mxu0 0.0
    %445 = vmatprep.subr.mxu0 0.0
    %446 = vmatpush1.msra.mxu0 0.0
    %447 = vmatprep.subr.mxu0 0.0
    %448 = vmatpush1.msra.mxu0 0.0
    %449 = vmatprep.subr.mxu0 0.0
    %450 = vmatpush1.msra.mxu0 0.0
    %451 = vmatprep.subr.mxu0 0.0
    %452 = vmatpush1.msra.mxu0 0.0
    %453 = vmatprep.subr.mxu0 0.0
    %454 = vmatpush1.msra.mxu0 0.0
    %455 = vmatprep.subr.mxu0 0.0
    %456 = vmatpush1.msra.mxu0 0.0
    %457 = vmatprep.subr.mxu0 0.0
    %458 = vmatpush1.msra.mxu0 0.0
    %459 = vmatprep.subr.mxu0 0.0
    %460 = vmatpush1.msra.mxu0 0.0
    %461 = vmatprep.subr.mxu0 0.0
    %462 = vmatpush1.msra.mxu0 0.0
    %463 = vmatprep.mubr.f32.mxu0 0.0
    %464 = vmatmul.mubr.f32.gmra.mrb[0].mxu0 %v388
    %v465 = vpop.f32.mrb[0].mxu0
    %v466 = vadd.f32 %v369, %v465
    %v467 = vpop.f32.mrb[0].mxu0
    %468 = vmatprep.mubr.f32.mxu0 0.0
    %469 = vmatmul.mubr.f32.gmra.mrb[0].mxu0 %v391
    %v470 = vpop.f32.mrb[0].mxu0
    %v471 = vadd.f32 %v374, %v470
    %v472 = vpop.f32.mrb[0].mxu0
    %473 = vmatprep.mubr.f32.mxu0 0.0
    %474 = vmatmul.mubr.f32.gmra.mrb[0].mxu0 %v394
    %v475 = vpop.f32.mrb[0].mxu0
    %v476 = vadd.f32 %v379, %v475
    %v477 = vpop.f32.mrb[0].mxu0
    %478 = vmatprep.mubr.f32.mxu0 0.0
    %479 = vmatmul.mubr.f32.gmra.mrb[0].mxu0 %v397
    %v480 = vpop.f32.mrb[0].mxu0
    %v481 = vadd.f32 %v384, %v480
    %v482 = vpop.f32.mrb[0].mxu0
    %483 = vdwg.mxu0
    %v484 = vmax.f32 %v466, 0.0
    %v485 = vmax.f32 %v471, 0.0
    %v486 = vmax.f32 %v476, 0.0
    %v487 = vmax.f32 %v481, 0.0
    %v488 = vld [vmem:[%s7] sm:$0x1f]
    %v489 = vld [vmem:[%s8] sm:$0x1f]
    %491 = vset.pattern.permute.xlu0 0
    %492 = vperm.xlu0 %491, %v489
    %v493 = vpop.permute.xlu0 %492
    %v496 = vsel %vm220, %v488, 0
    %498 = vmatprep.subr.mxu0 0.0
    %499 = vmatpush1.msra.mxu0 %v484
    %500 = vmatprep.subr.mxu0 0.0
    %501 = vmatpush1.msra.mxu0 %v485
    %502 = vmatprep.subr.mxu0 0.0
    %503 = vmatpush1.msra.mxu0 %v486
    %504 = vmatprep.subr.mxu0 0.0
    %505 = vmatpush1.msra.mxu0 %v487
    %506 = vmatprep.subr.mxu0 0.0
    %507 = vmatpush1.msra.mxu0 0.0
    %508 = vmatprep.subr.mxu0 0.0
    %509 = vmatpush1.msra.mxu0 0.0
    %510 = vmatprep.subr.mxu0 0.0
    %511 = vmatpush1.msra.mxu0 0.0
    %512 = vmatprep.subr.mxu0 0.0
    %513 = vmatpush1.msra.mxu0 0.0
    %514 = vmatprep.subr.mxu0 0.0
    %515 = vmatpush1.msra.mxu0 0.0
    %516 = vmatprep.subr.mxu0 0.0
    %517 = vmatpush1.msra.mxu0 0.0
    %518 = vmatprep.subr.mxu0 0.0
    %519 = vmatpush1.msra.mxu0 0.0
    %520 = vmatprep.subr.mxu0 0.0
    %521 = vmatpush1.msra.mxu0 0.0
    %522 = vmatprep.subr.mxu0 0.0
    %523 = vmatpush1.msra.mxu0 0.0
    %524 = vmatprep.subr.mxu0 0.0
    %525 = vmatpush1.msra.mxu0 0.0
    %526 = vmatprep.subr.mxu0 0.0
    %527 = vmatpush1.msra.mxu0 0.0
    %528 = vmatprep.subr.mxu0 0.0
    %529 = vmatpush1.msra.mxu0 0.0
    %530 = vmatprep.subr.mxu0 0.0
    %531 = vmatpush1.msra.mxu0 0.0
    %532 = vmatprep.subr.mxu0 0.0
    %533 = vmatpush1.msra.mxu0 0.0
    %534 = vmatprep.subr.mxu0 0.0
    %535 = vmatpush1.msra.mxu0 0.0
    %536 = vmatprep.subr.mxu0 0.0
    %537 = vmatpush1.msra.mxu0 0.0
    %538 = vmatprep.subr.mxu0 0.0
    %539 = vmatpush1.msra.mxu0 0.0
    %540 = vmatprep.subr.mxu0 0.0
    %541 = vmatpush1.msra.mxu0 0.0
    %542 = vmatprep.subr.mxu0 0.0
    %543 = vmatpush1.msra.mxu0 0.0
    %544 = vmatprep.subr.mxu0 0.0
    %545 = vmatpush1.msra.mxu0 0.0
    %546 = vmatprep.subr.mxu0 0.0
    %547 = vmatpush1.msra.mxu0 0.0
    %548 = vmatprep.subr.mxu0 0.0
    %549 = vmatpush1.msra.mxu0 0.0
    %550 = vmatprep.subr.mxu0 0.0
    %551 = vmatpush1.msra.mxu0 0.0
    %552 = vmatprep.subr.mxu0 0.0
    %553 = vmatpush1.msra.mxu0 0.0
    %554 = vmatprep.subr.mxu0 0.0
    %555 = vmatpush1.msra.mxu0 0.0
    %556 = vmatprep.subr.mxu0 0.0
    %557 = vmatpush1.msra.mxu0 0.0
    %558 = vmatprep.subr.mxu0 0.0
    %559 = vmatpush1.msra.mxu0 0.0
    %560 = vmatprep.subr.mxu0 0.0
    %561 = vmatpush1.msra.mxu0 0.0
    %562 = vmatprep.mubr.f32.mxu0 0.0
    %563 = vmatmul.mubr.f32.gmra.mrb[0].mxu0 %v496
    %v564 = vpop.f32.mrb[0].mxu0
    %v565 = vadd.f32 %v493, %v564
    %v566 = vpop.f32.mrb[0].mxu0
    %567 = vdwg.mxu0
    %568 = vst [vmem:[#allocation2] sm:$0x1f] %v565
    // Predicated region
    $region38: #{tpu_custom_call.1} parent=1 // pred_check
      _
    $region39: #{tpu_custom_call.1} parent=1 // pred_check_branch
      %570 = sbr.rel (0) target = $region41
    $region40: #{tpu_custom_call.1} parent=1 // pred_region
      %s572 = ssub.s32 128, 128
      %573 = vsyncadd [#allocation3], %s572
      %s575 = sshll.u32 [#allocation2], 4
      %s576 = int_to_ptr.vmem [resolvable:$true] %s575
      %578 = dma.vmem_to_hbm [thread:$0]  %s576, 128, %s9, [#allocation3]
    $region41: #{tpu_custom_call.1} parent=1 // pred_fallthru
      _
    // Predicated region
    $region42: #{tpu_custom_call.1} parent=1 // pred_check
      _
    $region43: #{tpu_custom_call.1} parent=1 // pred_check_branch
      %580 = sbr.rel (0) target = $region45
    $region44: #{tpu_custom_call.1} parent=1 // pred_region
      %581 = dma.done [#allocation3], 128
    $region45: #{tpu_custom_call.1} parent=1 // pred_fallthru
      _
    %582 = vsyncpa [#allocation3], 1

</llo_original>
